<compile_context>
chip_gen: v7x
topology: tpu7x:2x2x1
jax: 0.10.0
libtpu: 0.0.40
codegen_flags: <defaults>
</compile_context>

<pallas_src>
import math

import jax
import jax.numpy as jnp
from jax.experimental import pallas as pl
from jax.experimental.pallas import tpu as pltpu

# Small, forward-consistent shapes.
B, T, ENC_IN, D_MODEL, N_HEADS = 2, 8, 4, 32, 4
HD = D_MODEL // N_HEADS
FF = 4 * D_MODEL                       # 128
ROW_BLOCK = 8                          # samples processed per grid step

# Row offsets in the packed (R_TOTAL, 128) f32 parameter slab.
# Every weight starts on a row that is a multiple of 8 (sublane-aligned views).
R_W_IN = 0                             # (4, 32)    fci1 weight
R_W_V = 8                              # (32, 32)   attentionValue weight
R_W_FF1 = 40                           # (32, 128)  Block.linear weight
R_W_FF2 = 72                           # (128, 32)  Block.linear2 weight
R_W_FC1 = 200                          # (32, 32)   fc1
R_W_FC2 = 232                          # (32, 32)   fc2
R_W_FC3 = 264                          # (32, 32)   fc3
R_B_IN, R_B_V, R_B_FF1, R_B_FF2 = 296, 297, 298, 299
R_B_FC1, R_B_FC2, R_B_FC3 = 300, 301, 302
R_W_FC4 = 303                          # (1, 32)    fc4 weight stored as a row (VPU dot)
R_B_FC4 = 304                          # (1, 1)     fc4 bias
R_TOTAL = 312                          # multiple of 8; slab ~156 KB


def model_kernel(x_ref, p_ref, o_ref):
    # Only timestep 0 of x feeds the output (exact attention collapse, see header).
    x0 = x_ref[:, 0, :]                                    # (rows, ENC_IN)

    def lin(v, w_row, k, n, b_row, relu=False):
        w = p_ref[w_row:w_row + k, :n]                     # static slice of resident slab
        b = p_ref[b_row:b_row + 1, :n]
        y = jnp.dot(v, w, preferred_element_type=jnp.float32) + b
        return jnp.maximum(y, 0.0) if relu else y

    # fci1 + ReLU  (dropout1 = identity in eval mode)
    h = lin(x0, R_W_IN, ENC_IN, D_MODEL, R_B_IN, relu=True)        # (rows, 32)
    # MultiAttentionHead == attentionValue(h at t=0)  (exact collapse, see header)
    y = lin(h, R_W_V, D_MODEL, D_MODEL, R_B_V)                     # (rows, 32)
    # Block feed-forward  (dropout = identity in eval mode)
    y = lin(y, R_W_FF1, D_MODEL, FF, R_B_FF1, relu=True)           # (rows, 128)
    y = lin(y, R_W_FF2, FF, D_MODEL, R_B_FF2)                      # (rows, 32)
    # Output head
    y = lin(y, R_W_FC1, D_MODEL, D_MODEL, R_B_FC1, relu=True)
    y = lin(y, R_W_FC2, D_MODEL, D_MODEL, R_B_FC2, relu=True)
    y = lin(y, R_W_FC3, D_MODEL, D_MODEL, R_B_FC3, relu=True)
    # fc4 (32 -> 1): VPU multiply + lane reduction, no MXU round trip.
    w4 = p_ref[R_W_FC4:R_W_FC4 + 1, :D_MODEL]                      # (1, 32)
    b4 = p_ref[R_B_FC4:R_B_FC4 + 1, 0:1]                           # (1, 1)
    out = jnp.sum(y * w4, axis=-1, keepdims=True) + b4             # (rows, 1)
    o_ref[...] = out[:, :, None]                                   # (rows, 1, 1)


def make_params(key):
    """PyTorch-nn.Linear-style init; weights returned as (in, out), biases as (1, out)."""
    dims = [
        (ENC_IN, D_MODEL),          # fci1
        (D_MODEL, D_MODEL),         # attentionKey   (dead in forward, kept for the reference)
        (D_MODEL, D_MODEL),         # attentionQuery (dead in forward, kept for the reference)
        (D_MODEL, D_MODEL),         # attentionValue
        (D_MODEL, 4 * D_MODEL),     # Block.linear
        (4 * D_MODEL, D_MODEL),     # Block.linear2
        (D_MODEL, D_MODEL),         # fc1
        (D_MODEL, D_MODEL),         # fc2
        (D_MODEL, D_MODEL),         # fc3
        (D_MODEL, 1),               # fc4
    ]
    params = []
    keys = jax.random.split(key, len(dims))
    for k, (fi, fo) in zip(keys, dims):
        kw, kb = jax.random.split(k)
        bound = 1.0 / math.sqrt(fi)
        w = jax.random.uniform(kw, (fi, fo), jnp.float32, -bound, bound)
        b = jax.random.uniform(kb, (1, fo), jnp.float32, -bound, bound)
        params += [w, b]
    return params


def pack_params(params):
    """Pack all live weights/biases into a single (R_TOTAL, 128) slab (done once, offline)."""
    (w_in, b_in, wk, bk, wq, bq, wv, bv,
     w_ff1, b_ff1, w_ff2, b_ff2,
     w_fc1, b_fc1, w_fc2, b_fc2, w_fc3, b_fc3, w_fc4, b_fc4) = params
    del wk, bk, wq, bq                 # mathematically dead in this forward (see header)

    slab = jnp.zeros((R_TOTAL, 128), jnp.float32)

    def put(s, row, a):
        return s.at[row:row + a.shape[0], :a.shape[1]].set(a)

    slab = put(slab, R_W_IN, w_in)
    slab = put(slab, R_W_V, wv)
    slab = put(slab, R_W_FF1, w_ff1)
    slab = put(slab, R_W_FF2, w_ff2)
    slab = put(slab, R_W_FC1, w_fc1)
    slab = put(slab, R_W_FC2, w_fc2)
    slab = put(slab, R_W_FC3, w_fc3)
    slab = put(slab, R_B_IN, b_in)
    slab = put(slab, R_B_V, bv)
    slab = put(slab, R_B_FF1, b_ff1)
    slab = put(slab, R_B_FF2, b_ff2)
    slab = put(slab, R_B_FC1, b_fc1)
    slab = put(slab, R_B_FC2, b_fc2)
    slab = put(slab, R_B_FC3, b_fc3)
    slab = put(slab, R_W_FC4, w_fc4.T)          # stored as a (1, 32) row for the VPU dot
    slab = put(slab, R_B_FC4, b_fc4)            # (1, 1)
    return slab


def model_forward(x, param_slab):
    """Batched forward: x is (N, T, ENC_IN); all N samples share one pallas_call."""
    n = x.shape[0]
    n_blocks = pl.cdiv(n, ROW_BLOCK)
    n_pad = n_blocks * ROW_BLOCK
    if n_pad != n:
        x = jnp.pad(x, ((0, n_pad - n), (0, 0), (0, 0)))

    flops_per_sample = 2 * (ENC_IN * D_MODEL + 4 * D_MODEL * D_MODEL
                            + 2 * D_MODEL * FF + D_MODEL)
    bytes_accessed = (x.size + R_TOTAL * 128 + n_pad) * 4

    out = pl.pallas_call(
        model_kernel,
        out_shape=jax.ShapeDtypeStruct((n_pad, 1, 1), jnp.float32),
        grid=(n_blocks,),
        in_specs=[
            pl.BlockSpec((ROW_BLOCK, T, ENC_IN), lambda i: (i, 0, 0)),
            pl.BlockSpec((R_TOTAL, 128), lambda i: (0, 0)),   # weights stay VMEM-resident
        ],
        out_specs=pl.BlockSpec((ROW_BLOCK, 1, 1), lambda i: (i, 0, 0)),
        compiler_params=pltpu.CompilerParams(dimension_semantics=("parallel",)),
        cost_estimate=pl.CostEstimate(
            flops=int(flops_per_sample * n_pad),
            transcendentals=0,
            bytes_accessed=int(bytes_accessed)),
    )(x, param_slab)
    return out[:n]


def ref_forward(x, params):
    """Pure-JAX reference with the FULL attention path (validates the in-kernel collapse)."""
    (w_in, b_in, wk, bk, wq, bq, wv, bv,
     w_ff1, b_ff1, w_ff2, b_ff2,
     w_fc1, b_fc1, w_fc2, b_fc2, w_fc3, b_fc3, w_fc4, b_fc4) = params
    h = jax.nn.relu(x @ w_in + b_in)
    k = h @ wk + bk
    v = h @ wv + bv
    q = h[:, -1:, :] @ wq + bq
    Bn, Tn, D = h.shape
    kh = k.reshape(Bn, Tn, N_HEADS, HD).transpose(0, 2, 1, 3)
    vh = v.reshape(Bn, Tn, N_HEADS, HD).transpose(0, 2, 1, 3)
    qh = q.reshape(Bn, 1, N_HEADS, HD).transpose(0, 2, 1, 3)
    s = jnp.einsum('bhqd,bhkd->bhqk', qh, kh) / math.sqrt(HD)
    mask = jnp.arange(Tn)[None, :] <= jnp.arange(1)[:, None]   # torch SDPA top-left causal, L=1
    s = jnp.where(mask, s, -jnp.inf)
    p = jax.nn.softmax(s, axis=-1)
    y = jnp.einsum('bhqk,bhkd->bhqd', p, vh).transpose(0, 2, 1, 3).reshape(Bn, 1, D)
    y = jax.nn.relu(y @ w_ff1 + b_ff1)
    y = y @ w_ff2 + b_ff2
    y = jax.nn.relu(y @ w_fc1 + b_fc1)
    y = jax.nn.relu(y @ w_fc2 + b_fc2)
    y = jax.nn.relu(y @ w_fc3 + b_fc3)
    y = y @ w_fc4 + b_fc4
    return y


if __name__ == "__main__":
    key = jax.random.PRNGKey(0)
    k_x, k_p = jax.random.split(key)
    x = jax.random.normal(k_x, (B, T, ENC_IN), jnp.float32)
    params = make_params(k_p)
    slab = pack_params(params)          # offline packing, done once

    fwd = jax.jit(model_forward)

    out = jax.block_until_ready(fwd(x, slab))
    ref = ref_forward(x, params)
    assert out.shape == (B, 1, 1), out.shape
    assert jnp.allclose(out, ref, rtol=1e-4, atol=1e-4), (out, ref)

    # Larger batch: many independent forwards amortized over one weight-resident grid.
    xb = jax.random.normal(jax.random.PRNGKey(1), (64, T, ENC_IN), jnp.float32)
    outb = jax.block_until_ready(fwd(xb, slab))
    refb = ref_forward(xb, params)
    assert outb.shape == (64, 1, 1), outb.shape
    assert jnp.allclose(outb, refb, rtol=1e-4, atol=1e-4)

    print("KERNEL_OK")
</pallas_src>

<mosaic_0001>
module attributes {stable_mosaic.version = 11 : i64} {
  func.func @model_kernel(%arg0: i32, %arg1: memref<8x8x4xf32, #tpu.memory_space<vmem>>, %arg2: memref<312x128xf32, #tpu.memory_space<vmem>>, %arg3: memref<8x1x1xf32, #tpu.memory_space<vmem>>) attributes {dimension_semantics = [#tpu.dimension_semantics<parallel>], iteration_bounds = array<i64: 1>, scalar_prefetch = 0 : i64, scratch_operands = 0 : i64, tpu.core_type = #tpu.core_type<tc>, window_params = [{transform_indices = @transform_0, window_bounds = array<i64: 8, 8, 4>}, {pipeline_mode = #tpu.pipeline_mode<synchronous>, transform_indices = @transform_1, window_bounds = array<i64: 312, 128>}, {transform_indices = @transform_2, window_bounds = array<i64: 8, 1, 1>}]} {
    %c0 = arith.constant 0 : index
    %c0_0 = arith.constant 0 : index
    %c0_1 = arith.constant 0 : index
    %0 = vector.load %arg1[%c0, %c0_0, %c0_1] : memref<8x8x4xf32, #tpu.memory_space<vmem>>, vector<8x1x4xf32>
    %1 = vector.shape_cast %0 : vector<8x1x4xf32> to vector<8x4xf32>
    %c0_2 = arith.constant 0 : index
    %c0_3 = arith.constant 0 : index
    %2 = vector.load %arg2[%c0_2, %c0_3] : memref<312x128xf32, #tpu.memory_space<vmem>>, vector<4x32xf32>
    %c296 = arith.constant 296 : index
    %c0_4 = arith.constant 0 : index
    %3 = vector.load %arg2[%c296, %c0_4] : memref<312x128xf32, #tpu.memory_space<vmem>>, vector<1x32xf32>
    %cst = arith.constant dense<0.000000e+00> : vector<8x32xf32>
    %4 = tpu.matmul %1, %2, %cst {dimension_numbers = #tpu.dot_dimension_numbers<[1], [0], [0], [1], [0, 0, 1, 1], [], []>} : vector<8x4xf32>, vector<4x32xf32>, vector<8x32xf32> -> vector<8x32xf32>
    %5 = vector.broadcast %3 : vector<1x32xf32> to vector<8x32xf32>
    %6 = arith.addf %4, %5 : vector<8x32xf32>
    %cst_5 = arith.constant 0.000000e+00 : f32
    %7 = vector.broadcast %cst_5 : f32 to vector<8x32xf32>
    %8 = arith.maximumf %6, %7 : vector<8x32xf32>
    %c8 = arith.constant 8 : index
    %c0_6 = arith.constant 0 : index
    %9 = vector.load %arg2[%c8, %c0_6] : memref<312x128xf32, #tpu.memory_space<vmem>>, vector<32x32xf32>
    %c297 = arith.constant 297 : index
    %c0_7 = arith.constant 0 : index
    %10 = vector.load %arg2[%c297, %c0_7] : memref<312x128xf32, #tpu.memory_space<vmem>>, vector<1x32xf32>
    %cst_8 = arith.constant dense<0.000000e+00> : vector<8x32xf32>
    %11 = tpu.matmul %8, %9, %cst_8 {dimension_numbers = #tpu.dot_dimension_numbers<[1], [0], [0], [1], [0, 0, 1, 1], [], []>} : vector<8x32xf32>, vector<32x32xf32>, vector<8x32xf32> -> vector<8x32xf32>
    %12 = vector.broadcast %10 : vector<1x32xf32> to vector<8x32xf32>
    %13 = arith.addf %11, %12 : vector<8x32xf32>
    %c40 = arith.constant 40 : index
    %c0_9 = arith.constant 0 : index
    %14 = vector.load %arg2[%c40, %c0_9] : memref<312x128xf32, #tpu.memory_space<vmem>>, vector<32x128xf32>
    %c298 = arith.constant 298 : index
    %c0_10 = arith.constant 0 : index
    %15 = vector.load %arg2[%c298, %c0_10] : memref<312x128xf32, #tpu.memory_space<vmem>>, vector<1x128xf32>
    %cst_11 = arith.constant dense<0.000000e+00> : vector<8x128xf32>
    %16 = tpu.matmul %13, %14, %cst_11 {dimension_numbers = #tpu.dot_dimension_numbers<[1], [0], [0], [1], [0, 0, 1, 1], [], []>} : vector<8x32xf32>, vector<32x128xf32>, vector<8x128xf32> -> vector<8x128xf32>
    %17 = vector.broadcast %15 : vector<1x128xf32> to vector<8x128xf32>
    %18 = arith.addf %16, %17 : vector<8x128xf32>
    %cst_12 = arith.constant 0.000000e+00 : f32
    %19 = vector.broadcast %cst_12 : f32 to vector<8x128xf32>
    %20 = arith.maximumf %18, %19 : vector<8x128xf32>
    %c72 = arith.constant 72 : index
    %c0_13 = arith.constant 0 : index
    %21 = vector.load %arg2[%c72, %c0_13] : memref<312x128xf32, #tpu.memory_space<vmem>>, vector<128x32xf32>
    %c299 = arith.constant 299 : index
    %c0_14 = arith.constant 0 : index
    %22 = vector.load %arg2[%c299, %c0_14] : memref<312x128xf32, #tpu.memory_space<vmem>>, vector<1x32xf32>
    %cst_15 = arith.constant dense<0.000000e+00> : vector<8x32xf32>
    %23 = tpu.matmul %20, %21, %cst_15 {dimension_numbers = #tpu.dot_dimension_numbers<[1], [0], [0], [1], [0, 0, 1, 1], [], []>} : vector<8x128xf32>, vector<128x32xf32>, vector<8x32xf32> -> vector<8x32xf32>
    %24 = vector.broadcast %22 : vector<1x32xf32> to vector<8x32xf32>
    %25 = arith.addf %23, %24 : vector<8x32xf32>
    %c200 = arith.constant 200 : index
    %c0_16 = arith.constant 0 : index
    %26 = vector.load %arg2[%c200, %c0_16] : memref<312x128xf32, #tpu.memory_space<vmem>>, vector<32x32xf32>
    %c300 = arith.constant 300 : index
    %c0_17 = arith.constant 0 : index
    %27 = vector.load %arg2[%c300, %c0_17] : memref<312x128xf32, #tpu.memory_space<vmem>>, vector<1x32xf32>
    %cst_18 = arith.constant dense<0.000000e+00> : vector<8x32xf32>
    %28 = tpu.matmul %25, %26, %cst_18 {dimension_numbers = #tpu.dot_dimension_numbers<[1], [0], [0], [1], [0, 0, 1, 1], [], []>} : vector<8x32xf32>, vector<32x32xf32>, vector<8x32xf32> -> vector<8x32xf32>
    %29 = vector.broadcast %27 : vector<1x32xf32> to vector<8x32xf32>
    %30 = arith.addf %28, %29 : vector<8x32xf32>
    %cst_19 = arith.constant 0.000000e+00 : f32
    %31 = vector.broadcast %cst_19 : f32 to vector<8x32xf32>
    %32 = arith.maximumf %30, %31 : vector<8x32xf32>
    %c232 = arith.constant 232 : index
    %c0_20 = arith.constant 0 : index
    %33 = vector.load %arg2[%c232, %c0_20] : memref<312x128xf32, #tpu.memory_space<vmem>>, vector<32x32xf32>
    %c301 = arith.constant 301 : index
    %c0_21 = arith.constant 0 : index
    %34 = vector.load %arg2[%c301, %c0_21] : memref<312x128xf32, #tpu.memory_space<vmem>>, vector<1x32xf32>
    %cst_22 = arith.constant dense<0.000000e+00> : vector<8x32xf32>
    %35 = tpu.matmul %32, %33, %cst_22 {dimension_numbers = #tpu.dot_dimension_numbers<[1], [0], [0], [1], [0, 0, 1, 1], [], []>} : vector<8x32xf32>, vector<32x32xf32>, vector<8x32xf32> -> vector<8x32xf32>
    %36 = vector.broadcast %34 : vector<1x32xf32> to vector<8x32xf32>
    %37 = arith.addf %35, %36 : vector<8x32xf32>
    %cst_23 = arith.constant 0.000000e+00 : f32
    %38 = vector.broadcast %cst_23 : f32 to vector<8x32xf32>
    %39 = arith.maximumf %37, %38 : vector<8x32xf32>
    %c264 = arith.constant 264 : index
    %c0_24 = arith.constant 0 : index
    %40 = vector.load %arg2[%c264, %c0_24] : memref<312x128xf32, #tpu.memory_space<vmem>>, vector<32x32xf32>
    %c302 = arith.constant 302 : index
    %c0_25 = arith.constant 0 : index
    %41 = vector.load %arg2[%c302, %c0_25] : memref<312x128xf32, #tpu.memory_space<vmem>>, vector<1x32xf32>
    %cst_26 = arith.constant dense<0.000000e+00> : vector<8x32xf32>
    %42 = tpu.matmul %39, %40, %cst_26 {dimension_numbers = #tpu.dot_dimension_numbers<[1], [0], [0], [1], [0, 0, 1, 1], [], []>} : vector<8x32xf32>, vector<32x32xf32>, vector<8x32xf32> -> vector<8x32xf32>
    %43 = vector.broadcast %41 : vector<1x32xf32> to vector<8x32xf32>
    %44 = arith.addf %42, %43 : vector<8x32xf32>
    %cst_27 = arith.constant 0.000000e+00 : f32
    %45 = vector.broadcast %cst_27 : f32 to vector<8x32xf32>
    %46 = arith.maximumf %44, %45 : vector<8x32xf32>
    %c303 = arith.constant 303 : index
    %c0_28 = arith.constant 0 : index
    %47 = vector.load %arg2[%c303, %c0_28] : memref<312x128xf32, #tpu.memory_space<vmem>>, vector<1x32xf32>
    %c304 = arith.constant 304 : index
    %c0_29 = arith.constant 0 : index
    %48 = vector.load %arg2[%c304, %c0_29] : memref<312x128xf32, #tpu.memory_space<vmem>>, vector<1x1xf32>
    %49 = vector.broadcast %47 : vector<1x32xf32> to vector<8x32xf32>
    %50 = arith.mulf %46, %49 : vector<8x32xf32>
    %cst_30 = arith.constant dense<0.000000e+00> : vector<8xf32>
    %51 = vector.multi_reduction <add>, %50, %cst_30 [1] : vector<8x32xf32> to vector<8xf32>
    %52 = vector.shape_cast %51 : vector<8xf32> to vector<8x1xf32>
    %53 = vector.broadcast %48 : vector<1x1xf32> to vector<8x1xf32>
    %54 = arith.addf %52, %53 : vector<8x1xf32>
    %55 = vector.shape_cast %54 : vector<8x1xf32> to vector<8x1x1xf32>
    %c0_31 = arith.constant 0 : index
    %c0_32 = arith.constant 0 : index
    %c0_33 = arith.constant 0 : index
    %56 = vector.load %arg3[%c0_31, %c0_32, %c0_33] : memref<8x1x1xf32, #tpu.memory_space<vmem>>, vector<8x1x1xf32>
    tpu.vector_store %arg3[%c0_31, %c0_32, %c0_33], %55 {strides = array<i32>} : memref<8x1x1xf32, #tpu.memory_space<vmem>>, vector<8x1x1xf32>,
    return
  }
  func.func @transform_0(%arg0: i32) -> (i32, i32, i32) {
    %c0_i32 = arith.constant 0 : i32
    %c0_i32_0 = arith.constant 0 : i32
    %c0_i32_1 = arith.constant 0 : i32
    return %arg0, %c0_i32, %c0_i32_0 : i32, i32, i32
  }
  func.func @transform_1(%arg0: i32) -> (i32, i32) {
    %c0_i32 = arith.constant 0 : i32
    %c0_i32_0 = arith.constant 0 : i32
    %c0_i32_1 = arith.constant 0 : i32
    return %c0_i32, %c0_i32_0 : i32, i32
  }
  func.func @transform_2(%arg0: i32) -> (i32, i32, i32) {
    %c0_i32 = arith.constant 0 : i32
    %c0_i32_0 = arith.constant 0 : i32
    %c0_i32_1 = arith.constant 0 : i32
    return %arg0, %c0_i32, %c0_i32_0 : i32, i32, i32
  }
}

</mosaic_0001>

<llo_original>
// kernel: model_forward.1
$region0: #{model_forward.1}
  #allocation0 [shape = 'u32[]', space=smem, size = 0x4, offset = 0x4, fixed_abs, tag = 'smem constant byte address 0x4 - core index']
  #allocation1 [shape = 'u32[144,128]{1,0:T(1,128)}', space=vmem, size = 0x12000, scoped, tag = 'internal scratch']
  %s0 = inlined_call_operand.vmem [shape: f32[8,8,4], index: 0, kind: input, shape index: {}]
  %s1 = inlined_call_operand.hbm [shape: f32[312,128], index: 1, kind: input, shape index: {}]
  %s2 = inlined_call_operand.vmem [shape: f32[8,1,1], index: 2, kind: output, shape index: {}]
  %s3 = sld [smem:[#allocation0]]
  $region22: #{model_forward.1} parent=0
    _
  %s5 = ssub.s32 1, %s3
  %s6 = scalar_select 0, %s5, %s3
  $region1: #{model_forward.1} parent=0
    #allocation2 [shape = 'u8[159744]{0}', space=vmem, size = 0x27000, scoped, tag = 'input window, operand 1, single buffered']
    #allocation3 [shape = 's32[1]{0}', space=sflag, size = 0x4, scoped, tag = 'scoped memory for model_forward.1']
    %7 = vsyncpa [#allocation3], 0
    // Predicated region
    $region2: #{model_forward.1} parent=1 // pred_check
      _
    $region3: #{model_forward.1} parent=1 // pred_check_branch
      %9 = sbr.rel (0) target = $region5
    $region4: #{model_forward.1} parent=1 // pred_region
      _
    $region5: #{model_forward.1} parent=1 // pred_fallthru
      _
    // Predicated region
    $region6: #{model_forward.1} parent=1 // pred_check
      _
    $region7: #{model_forward.1} parent=1 // pred_check_branch
      %11 = sbr.rel (0) target = $region9
    $region8: #{model_forward.1} parent=1 // pred_region
      %s13 = ssub.s32 4992, 4992
      %14 = vsyncadd [#allocation3], %s13
      %s15 = sshll.u32 [#allocation2], 4
      %s16 = int_to_ptr.vmem [resolvable:$true] %s15
      %21 = dma.hbm_to_vmem [thread:$0]  %s1, 4992, %s16, [#allocation3], 128, 128, 8
    $region9: #{model_forward.1} parent=1 // pred_fallthru
      _
    // Predicated region
    $region10: #{model_forward.1} parent=1 // pred_check
      _
    $region11: #{model_forward.1} parent=1 // pred_check_branch
      %23 = sbr.rel (0) target = $region13
    $region12: #{model_forward.1} parent=1 // pred_region
      %24 = dma.done [#allocation3], 4992
    $region13: #{model_forward.1} parent=1 // pred_fallthru
      _
    %v25 = vld [vmem:[%s0] sm:$0x1]
    %v26 = vld [vmem:[%s0 + $0x8] sm:$0x1]
    %v27 = vld [vmem:[%s0 + $0x10] sm:$0x1]
    %v28 = vld [vmem:[%s0 + $0x18] sm:$0x1]
    %v29 = vld [vmem:[%s0 + $0x20] sm:$0x1]
    %v30 = vld [vmem:[%s0 + $0x28] sm:$0x1]
    %v31 = vld [vmem:[%s0 + $0x30] sm:$0x1]
    %v32 = vld [vmem:[%s0 + $0x38] sm:$0x1]
    %v33 = vld [vmem:[#allocation2] sm:$0xf]
    %v34 = vld [vmem:[#allocation2 + $0x128] sm:$0x1]
    %v35 = vlaneseq
    %v36 = vshrl.u32 %v35, 7
    %v37 = vsub.s32 0, %v36
    %v38 = vrot.slane %v34, %v37
    %v47 = vrot.slane %v26, 7
    %vm48 = vcmask 1041409
    %v49 = vsel %vm48, %v47, %v25
    %v50 = vrot.slane %v27, 6
    %vm51 = vcmask 1042434
    %v52 = vsel %vm51, %v50, %v49
    %v53 = vrot.slane %v28, 5
    %vm54 = vcmask 1043459
    %v55 = vsel %vm54, %v53, %v52
    %v56 = vrot.slane %v29, 4
    %vm57 = vcmask 1044484
    %v58 = vsel %vm57, %v56, %v55
    %v59 = vrot.slane %v30, 3
    %vm60 = vcmask 1045509
    %v61 = vsel %vm60, %v59, %v58
    %v62 = vrot.slane %v31, 2
    %vm63 = vcmask 1046534
    %v64 = vsel %vm63, %v62, %v61
    %v65 = vrot.slane %v32, 1
    %vm66 = vcmask 1047559
    %v67 = vsel %vm66, %v65, %v64
    %vm68 = vcmask 31744
    %v69 = vsel %vm68, %v67, 0
    %vm71 = vcmask 1043456
    %v73 = vsel %vm71, %v33, 0
    %75 = vmatprep.subr.mxu0 0.0
    %76 = vmatpush1.msra.mxu0 %v73
    %77 = vmatprep.subr.mxu0 0.0
    %78 = vmatpush1.msra.mxu0 0.0
    %79 = vmatprep.subr.mxu0 0.0
    %80 = vmatpush1.msra.mxu0 0.0
    %81 = vmatprep.subr.mxu0 0.0
    %82 = vmatpush1.msra.mxu0 0.0
    %83 = vmatprep.subr.mxu0 0.0
    %84 = vmatpush1.msra.mxu0 0.0
    %85 = vmatprep.subr.mxu0 0.0
    %86 = vmatpush1.msra.mxu0 0.0
    %87 = vmatprep.subr.mxu0 0.0
    %88 = vmatpush1.msra.mxu0 0.0
    %89 = vmatprep.subr.mxu0 0.0
    %90 = vmatpush1.msra.mxu0 0.0
    %91 = vmatprep.subr.mxu0 0.0
    %92 = vmatpush1.msra.mxu0 0.0
    %93 = vmatprep.subr.mxu0 0.0
    %94 = vmatpush1.msra.mxu0 0.0
    %95 = vmatprep.subr.mxu0 0.0
    %96 = vmatpush1.msra.mxu0 0.0
    %97 = vmatprep.subr.mxu0 0.0
    %98 = vmatpush1.msra.mxu0 0.0
    %99 = vmatprep.subr.mxu0 0.0
    %100 = vmatpush1.msra.mxu0 0.0
    %101 = vmatprep.subr.mxu0 0.0
    %102 = vmatpush1.msra.mxu0 0.0
    %103 = vmatprep.subr.mxu0 0.0
    %104 = vmatpush1.msra.mxu0 0.0
    %105 = vmatprep.subr.mxu0 0.0
    %106 = vmatpush1.msra.mxu0 0.0
    %107 = vmatprep.subr.mxu0 0.0
    %108 = vmatpush1.msra.mxu0 0.0
    %109 = vmatprep.subr.mxu0 0.0
    %110 = vmatpush1.msra.mxu0 0.0
    %111 = vmatprep.subr.mxu0 0.0
    %112 = vmatpush1.msra.mxu0 0.0
    %113 = vmatprep.subr.mxu0 0.0
    %114 = vmatpush1.msra.mxu0 0.0
    %115 = vmatprep.subr.mxu0 0.0
    %116 = vmatpush1.msra.mxu0 0.0
    %117 = vmatprep.subr.mxu0 0.0
    %118 = vmatpush1.msra.mxu0 0.0
    %119 = vmatprep.subr.mxu0 0.0
    %120 = vmatpush1.msra.mxu0 0.0
    %121 = vmatprep.subr.mxu0 0.0
    %122 = vmatpush1.msra.mxu0 0.0
    %123 = vmatprep.subr.mxu0 0.0
    %124 = vmatpush1.msra.mxu0 0.0
    %125 = vmatprep.subr.mxu0 0.0
    %126 = vmatpush1.msra.mxu0 0.0
    %127 = vmatprep.subr.mxu0 0.0
    %128 = vmatpush1.msra.mxu0 0.0
    %129 = vmatprep.subr.mxu0 0.0
    %130 = vmatpush1.msra.mxu0 0.0
    %131 = vmatprep.subr.mxu0 0.0
    %132 = vmatpush1.msra.mxu0 0.0
    %133 = vmatprep.subr.mxu0 0.0
    %134 = vmatpush1.msra.mxu0 0.0
    %135 = vmatprep.subr.mxu0 0.0
    %136 = vmatpush1.msra.mxu0 0.0
    %137 = vmatprep.subr.mxu0 0.0
    %138 = vmatpush1.msra.mxu0 0.0
    %139 = vmatprep.mubr.f32.mxu0 0.0
    %140 = vmatmul.mubr.f32.gmra.mrb[0].mxu0 %v69
    %v141 = vpop.f32.mrb[0].mxu0
    %v142 = vadd.f32 %v38, %v141
    %v143 = vpop.f32.mrb[0].mxu0
    %144 = vdwg.mxu0
    %v145 = vmax.f32 %v142, 0.0
    %v146 = vld [vmem:[#allocation2 + $0x8] sm:$0xff]
    %v147 = vld [vmem:[#allocation2 + $0x10] sm:$0xff]
    %v148 = vld [vmem:[#allocation2 + $0x18] sm:$0xff]
    %v149 = vld [vmem:[#allocation2 + $0x20] sm:$0xff]
    %v150 = vld [vmem:[#allocation2 + $0x129] sm:$0x1]
    %v151 = vlaneseq
    %v152 = vshrl.u32 %v151, 7
    %v153 = vsub.s32 0, %v152
    %v154 = vrot.slane %v150, %v153
    %vm155 = vcmask 261120
    %v157 = vsel %vm155, %v145, 0
    %159 = vmatprep.subr.mxu0 0.0
    %160 = vmatpush1.msra.mxu0 %v146
    %161 = vmatprep.subr.mxu0 0.0
    %162 = vmatpush1.msra.mxu0 %v147
    %163 = vmatprep.subr.mxu0 0.0
    %164 = vmatpush1.msra.mxu0 %v148
    %165 = vmatprep.subr.mxu0 0.0
    %166 = vmatpush1.msra.mxu0 %v149
    %167 = vmatprep.subr.mxu0 0.0
    %168 = vmatpush1.msra.mxu0 0.0
    %169 = vmatprep.subr.mxu0 0.0
    %170 = vmatpush1.msra.mxu0 0.0
    %171 = vmatprep.subr.mxu0 0.0
    %172 = vmatpush1.msra.mxu0 0.0
    %173 = vmatprep.subr.mxu0 0.0
    %174 = vmatpush1.msra.mxu0 0.0
    %175 = vmatprep.subr.mxu0 0.0
    %176 = vmatpush1.msra.mxu0 0.0
    %177 = vmatprep.subr.mxu0 0.0
    %178 = vmatpush1.msra.mxu0 0.0
    %179 = vmatprep.subr.mxu0 0.0
    %180 = vmatpush1.msra.mxu0 0.0
    %181 = vmatprep.subr.mxu0 0.0
    %182 = vmatpush1.msra.mxu0 0.0
    %183 = vmatprep.subr.mxu0 0.0
    %184 = vmatpush1.msra.mxu0 0.0
    %185 = vmatprep.subr.mxu0 0.0
    %186 = vmatpush1.msra.mxu0 0.0
    %187 = vmatprep.subr.mxu0 0.0
    %188 = vmatpush1.msra.mxu0 0.0
    %189 = vmatprep.subr.mxu0 0.0
    %190 = vmatpush1.msra.mxu0 0.0
    %191 = vmatprep.subr.mxu0 0.0
    %192 = vmatpush1.msra.mxu0 0.0
    %193 = vmatprep.subr.mxu0 0.0
    %194 = vmatpush1.msra.mxu0 0.0
    %195 = vmatprep.subr.mxu0 0.0
    %196 = vmatpush1.msra.mxu0 0.0
    %197 = vmatprep.subr.mxu0 0.0
    %198 = vmatpush1.msra.mxu0 0.0
    %199 = vmatprep.subr.mxu0 0.0
    %200 = vmatpush1.msra.mxu0 0.0
    %201 = vmatprep.subr.mxu0 0.0
    %202 = vmatpush1.msra.mxu0 0.0
    %203 = vmatprep.subr.mxu0 0.0
    %204 = vmatpush1.msra.mxu0 0.0
    %205 = vmatprep.subr.mxu0 0.0
    %206 = vmatpush1.msra.mxu0 0.0
    %207 = vmatprep.subr.mxu0 0.0
    %208 = vmatpush1.msra.mxu0 0.0
    %209 = vmatprep.subr.mxu0 0.0
    %210 = vmatpush1.msra.mxu0 0.0
    %211 = vmatprep.subr.mxu0 0.0
    %212 = vmatpush1.msra.mxu0 0.0
    %213 = vmatprep.subr.mxu0 0.0
    %214 = vmatpush1.msra.mxu0 0.0
    %215 = vmatprep.subr.mxu0 0.0
    %216 = vmatpush1.msra.mxu0 0.0
    %217 = vmatprep.subr.mxu0 0.0
    %218 = vmatpush1.msra.mxu0 0.0
    %219 = vmatprep.subr.mxu0 0.0
    %220 = vmatpush1.msra.mxu0 0.0
    %221 = vmatprep.subr.mxu0 0.0
    %222 = vmatpush1.msra.mxu0 0.0
    %223 = vmatprep.mubr.f32.mxu0 0.0
    %224 = vmatmul.mubr.f32.gmra.mrb[0].mxu0 %v157
    %v225 = vpop.f32.mrb[0].mxu0
    %v226 = vadd.f32 %v154, %v225
    %v227 = vpop.f32.mrb[0].mxu0
    %228 = vdwg.mxu0
    %v229 = vld [vmem:[#allocation2 + $0x28] sm:$0xff]
    %v230 = vld [vmem:[#allocation2 + $0x30] sm:$0xff]
    %v231 = vld [vmem:[#allocation2 + $0x38] sm:$0xff]
    %v232 = vld [vmem:[#allocation2 + $0x40] sm:$0xff]
    %v233 = vld [vmem:[#allocation2 + $0x12a] sm:$0x1]
    %v234 = vlaneseq
    %v235 = vshrl.u32 %v234, 7
    %v236 = vsub.s32 0, %v235
    %v237 = vrot.slane %v233, %v236
    %v239 = vsel %vm155, %v226, 0
    %241 = vmatprep.subr.mxu0 0.0
    %242 = vmatpush1.msra.mxu0 %v229
    %243 = vmatprep.subr.mxu0 0.0
    %244 = vmatpush1.msra.mxu0 %v230
    %245 = vmatprep.subr.mxu0 0.0
    %246 = vmatpush1.msra.mxu0 %v231
    %247 = vmatprep.subr.mxu0 0.0
    %248 = vmatpush1.msra.mxu0 %v232
    %249 = vmatprep.subr.mxu0 0.0
    %250 = vmatpush1.msra.mxu0 0.0
    %251 = vmatprep.subr.mxu0 0.0
    %252 = vmatpush1.msra.mxu0 0.0
    %253 = vmatprep.subr.mxu0 0.0
    %254 = vmatpush1.msra.mxu0 0.0
    %255 = vmatprep.subr.mxu0 0.0
    %256 = vmatpush1.msra.mxu0 0.0
    %257 = vmatprep.subr.mxu0 0.0
    %258 = vmatpush1.msra.mxu0 0.0
    %259 = vmatprep.subr.mxu0 0.0
    %260 = vmatpush1.msra.mxu0 0.0
    %261 = vmatprep.subr.mxu0 0.0
    %262 = vmatpush1.msra.mxu0 0.0
    %263 = vmatprep.subr.mxu0 0.0
    %264 = vmatpush1.msra.mxu0 0.0
    %265 = vmatprep.subr.mxu0 0.0
    %266 = vmatpush1.msra.mxu0 0.0
    %267 = vmatprep.subr.mxu0 0.0
    %268 = vmatpush1.msra.mxu0 0.0
    %269 = vmatprep.subr.mxu0 0.0
    %270 = vmatpush1.msra.mxu0 0.0
    %271 = vmatprep.subr.mxu0 0.0
    %272 = vmatpush1.msra.mxu0 0.0
    %273 = vmatprep.subr.mxu0 0.0
    %274 = vmatpush1.msra.mxu0 0.0
    %275 = vmatprep.subr.mxu0 0.0
    %276 = vmatpush1.msra.mxu0 0.0
    %277 = vmatprep.subr.mxu0 0.0
    %278 = vmatpush1.msra.mxu0 0.0
    %279 = vmatprep.subr.mxu0 0.0
    %280 = vmatpush1.msra.mxu0 0.0
    %281 = vmatprep.subr.mxu0 0.0
    %282 = vmatpush1.msra.mxu0 0.0
    %283 = vmatprep.subr.mxu0 0.0
    %284 = vmatpush1.msra.mxu0 0.0
    %285 = vmatprep.subr.mxu0 0.0
    %286 = vmatpush1.msra.mxu0 0.0
    %287 = vmatprep.subr.mxu0 0.0
    %288 = vmatpush1.msra.mxu0 0.0
    %289 = vmatprep.subr.mxu0 0.0
    %290 = vmatpush1.msra.mxu0 0.0
    %291 = vmatprep.subr.mxu0 0.0
    %292 = vmatpush1.msra.mxu0 0.0
    %293 = vmatprep.subr.mxu0 0.0
    %294 = vmatpush1.msra.mxu0 0.0
    %295 = vmatprep.subr.mxu0 0.0
    %296 = vmatpush1.msra.mxu0 0.0
    %297 = vmatprep.subr.mxu0 0.0
    %298 = vmatpush1.msra.mxu0 0.0
    %299 = vmatprep.subr.mxu0 0.0
    %300 = vmatpush1.msra.mxu0 0.0
    %301 = vmatprep.subr.mxu0 0.0
    %302 = vmatpush1.msra.mxu0 0.0
    %303 = vmatprep.subr.mxu0 0.0
    %304 = vmatpush1.msra.mxu0 0.0
    %305 = vmatprep.mubr.f32.mxu0 0.0
    %306 = vmatmul.mubr.f32.gmra.mrb[0].mxu0 %v239
    %v307 = vpop.f32.mrb[0].mxu0
    %v308 = vadd.f32 %v237, %v307
    %v309 = vpop.f32.mrb[0].mxu0
    %310 = vdwg.mxu0
    %v311 = vmax.f32 %v308, 0.0
    %v312 = vld [vmem:[#allocation2 + $0x48] sm:$0xff]
    %v313 = vld [vmem:[#allocation2 + $0x50] sm:$0xff]
    %v314 = vld [vmem:[#allocation2 + $0x58] sm:$0xff]
    %v315 = vld [vmem:[#allocation2 + $0x60] sm:$0xff]
    %v316 = vld [vmem:[#allocation2 + $0x68] sm:$0xff]
    %v317 = vld [vmem:[#allocation2 + $0x70] sm:$0xff]
    %v318 = vld [vmem:[#allocation2 + $0x78] sm:$0xff]
    %v319 = vld [vmem:[#allocation2 + $0x80] sm:$0xff]
    %v320 = vld [vmem:[#allocation2 + $0x88] sm:$0xff]
    %v321 = vld [vmem:[#allocation2 + $0x90] sm:$0xff]
    %v322 = vld [vmem:[#allocation2 + $0x98] sm:$0xff]
    %v323 = vld [vmem:[#allocation2 + $0xa0] sm:$0xff]
    %v324 = vld [vmem:[#allocation2 + $0xa8] sm:$0xff]
    %v325 = vld [vmem:[#allocation2 + $0xb0] sm:$0xff]
    %v326 = vld [vmem:[#allocation2 + $0xb8] sm:$0xff]
    %v327 = vld [vmem:[#allocation2 + $0xc0] sm:$0xff]
    %v328 = vld [vmem:[#allocation2 + $0x12b] sm:$0x1]
    %v329 = vlaneseq
    %v330 = vshrl.u32 %v329, 7
    %v331 = vsub.s32 0, %v330
    %v332 = vrot.slane %v328, %v331
    %333 = vmatprep.subr.mxu0 0.0
    %334 = vmatpush1.msra.mxu0 %v312
    %335 = vmatprep.subr.mxu0 0.0
    %336 = vmatpush1.msra.mxu0 %v313
    %337 = vmatprep.subr.mxu0 0.0
    %338 = vmatpush1.msra.mxu0 %v314
    %339 = vmatprep.subr.mxu0 0.0
    %340 = vmatpush1.msra.mxu0 %v315
    %341 = vmatprep.subr.mxu0 0.0
    %342 = vmatpush1.msra.mxu0 %v316
    %343 = vmatprep.subr.mxu0 0.0
    %344 = vmatpush1.msra.mxu0 %v317
    %345 = vmatprep.subr.mxu0 0.0
    %346 = vmatpush1.msra.mxu0 %v318
    %347 = vmatprep.subr.mxu0 0.0
    %348 = vmatpush1.msra.mxu0 %v319
    %349 = vmatprep.subr.mxu0 0.0
    %350 = vmatpush1.msra.mxu0 %v320
    %351 = vmatprep.subr.mxu0 0.0
    %352 = vmatpush1.msra.mxu0 %v321
    %353 = vmatprep.subr.mxu0 0.0
    %354 = vmatpush1.msra.mxu0 %v322
    %355 = vmatprep.subr.mxu0 0.0
    %356 = vmatpush1.msra.mxu0 %v323
    %357 = vmatprep.subr.mxu0 0.0
    %358 = vmatpush1.msra.mxu0 %v324
    %359 = vmatprep.subr.mxu0 0.0
    %360 = vmatpush1.msra.mxu0 %v325
    %361 = vmatprep.subr.mxu0 0.0
    %362 = vmatpush1.msra.mxu0 %v326
    %363 = vmatprep.subr.mxu0 0.0
    %364 = vmatpush1.msra.mxu0 %v327
    %365 = vmatprep.subr.mxu0 0.0
    %366 = vmatpush1.msra.mxu0 0.0
    %367 = vmatprep.subr.mxu0 0.0
    %368 = vmatpush1.msra.mxu0 0.0
    %369 = vmatprep.subr.mxu0 0.0
    %370 = vmatpush1.msra.mxu0 0.0
    %371 = vmatprep.subr.mxu0 0.0
    %372 = vmatpush1.msra.mxu0 0.0
    %373 = vmatprep.subr.mxu0 0.0
    %374 = vmatpush1.msra.mxu0 0.0
    %375 = vmatprep.subr.mxu0 0.0
    %376 = vmatpush1.msra.mxu0 0.0
    %377 = vmatprep.subr.mxu0 0.0
    %378 = vmatpush1.msra.mxu0 0.0
    %379 = vmatprep.subr.mxu0 0.0
    %380 = vmatpush1.msra.mxu0 0.0
    %381 = vmatprep.subr.mxu0 0.0
    %382 = vmatpush1.msra.mxu0 0.0
    %383 = vmatprep.subr.mxu0 0.0
    %384 = vmatpush1.msra.mxu0 0.0
    %385 = vmatprep.subr.mxu0 0.0
    %386 = vmatpush1.msra.mxu0 0.0
    %387 = vmatprep.subr.mxu0 0.0
    %388 = vmatpush1.msra.mxu0 0.0
    %389 = vmatprep.subr.mxu0 0.0
    %390 = vmatpush1.msra.mxu0 0.0
    %391 = vmatprep.subr.mxu0 0.0
    %392 = vmatpush1.msra.mxu0 0.0
    %393 = vmatprep.subr.mxu0 0.0
    %394 = vmatpush1.msra.mxu0 0.0
    %395 = vmatprep.subr.mxu0 0.0
    %396 = vmatpush1.msra.mxu0 0.0
    %397 = vmatprep.mubr.f32.mxu0 0.0
    %398 = vmatmul.mubr.f32.gmra.mrb[0].mxu0 %v311
    %v399 = vpop.f32.mrb[0].mxu0
    %v400 = vadd.f32 %v332, %v399
    %v401 = vpop.f32.mrb[0].mxu0
    %402 = vdwg.mxu0
    %v403 = vld [vmem:[#allocation2 + $0xc8] sm:$0xff]
    %v404 = vld [vmem:[#allocation2 + $0xd0] sm:$0xff]
    %v405 = vld [vmem:[#allocation2 + $0xd8] sm:$0xff]
    %v406 = vld [vmem:[#allocation2 + $0xe0] sm:$0xff]
    %v407 = vld [vmem:[#allocation2 + $0x12c] sm:$0x1]
    %v408 = vlaneseq
    %v409 = vshrl.u32 %v408, 7
    %v410 = vsub.s32 0, %v409
    %v411 = vrot.slane %v407, %v410
    %v413 = vsel %vm155, %v400, 0
    %415 = vmatprep.subr.mxu0 0.0
    %416 = vmatpush1.msra.mxu0 %v403
    %417 = vmatprep.subr.mxu0 0.0
    %418 = vmatpush1.msra.mxu0 %v404
    %419 = vmatprep.subr.mxu0 0.0
    %420 = vmatpush1.msra.mxu0 %v405
    %421 = vmatprep.subr.mxu0 0.0
    %422 = vmatpush1.msra.mxu0 %v406
    %423 = vmatprep.subr.mxu0 0.0
    %424 = vmatpush1.msra.mxu0 0.0
    %425 = vmatprep.subr.mxu0 0.0
    %426 = vmatpush1.msra.mxu0 0.0
    %427 = vmatprep.subr.mxu0 0.0
    %428 = vmatpush1.msra.mxu0 0.0
    %429 = vmatprep.subr.mxu0 0.0
    %430 = vmatpush1.msra.mxu0 0.0
    %431 = vmatprep.subr.mxu0 0.0
    %432 = vmatpush1.msra.mxu0 0.0
    %433 = vmatprep.subr.mxu0 0.0
    %434 = vmatpush1.msra.mxu0 0.0
    %435 = vmatprep.subr.mxu0 0.0
    %436 = vmatpush1.msra.mxu0 0.0
    %437 = vmatprep.subr.mxu0 0.0
    %438 = vmatpush1.msra.mxu0 0.0
    %439 = vmatprep.subr.mxu0 0.0
    %440 = vmatpush1.msra.mxu0 0.0
    %441 = vmatprep.subr.mxu0 0.0
    %442 = vmatpush1.msra.mxu0 0.0
    %443 = vmatprep.subr.mxu0 0.0
    %444 = vmatpush1.msra.mxu0 0.0
    %445 = vmatprep.subr.mxu0 0.0
    %446 = vmatpush1.msra.mxu0 0.0
    %447 = vmatprep.subr.mxu0 0.0
    %448 = vmatpush1.msra.mxu0 0.0
    %449 = vmatprep.subr.mxu0 0.0
    %450 = vmatpush1.msra.mxu0 0.0
    %451 = vmatprep.subr.mxu0 0.0
    %452 = vmatpush1.msra.mxu0 0.0
    %453 = vmatprep.subr.mxu0 0.0
    %454 = vmatpush1.msra.mxu0 0.0
    %455 = vmatprep.subr.mxu0 0.0
    %456 = vmatpush1.msra.mxu0 0.0
    %457 = vmatprep.subr.mxu0 0.0
    %458 = vmatpush1.msra.mxu0 0.0
    %459 = vmatprep.subr.mxu0 0.0
    %460 = vmatpush1.msra.mxu0 0.0
    %461 = vmatprep.subr.mxu0 0.0
    %462 = vmatpush1.msra.mxu0 0.0
    %463 = vmatprep.subr.mxu0 0.0
    %464 = vmatpush1.msra.mxu0 0.0
    %465 = vmatprep.subr.mxu0 0.0
    %466 = vmatpush1.msra.mxu0 0.0
    %467 = vmatprep.subr.mxu0 0.0
    %468 = vmatpush1.msra.mxu0 0.0
    %469 = vmatprep.subr.mxu0 0.0
    %470 = vmatpush1.msra.mxu0 0.0
    %471 = vmatprep.subr.mxu0 0.0
    %472 = vmatpush1.msra.mxu0 0.0
    %473 = vmatprep.subr.mxu0 0.0
    %474 = vmatpush1.msra.mxu0 0.0
    %475 = vmatprep.subr.mxu0 0.0
    %476 = vmatpush1.msra.mxu0 0.0
    %477 = vmatprep.subr.mxu0 0.0
    %478 = vmatpush1.msra.mxu0 0.0
    %479 = vmatprep.mubr.f32.mxu0 0.0
    %480 = vmatmul.mubr.f32.gmra.mrb[0].mxu0 %v413
    %v481 = vpop.f32.mrb[0].mxu0
    %v482 = vadd.f32 %v411, %v481
    %v483 = vpop.f32.mrb[0].mxu0
    %484 = vdwg.mxu0
    %v485 = vmax.f32 %v482, 0.0
    %v486 = vld [vmem:[#allocation2 + $0xe8] sm:$0xff]
    %v487 = vld [vmem:[#allocation2 + $0xf0] sm:$0xff]
    %v488 = vld [vmem:[#allocation2 + $0xf8] sm:$0xff]
    %v489 = vld [vmem:[#allocation2 + $0x100] sm:$0xff]
    %v490 = vld [vmem:[#allocation2 + $0x12d] sm:$0x1]
    %v491 = vlaneseq
    %v492 = vshrl.u32 %v491, 7
    %v493 = vsub.s32 0, %v492
    %v494 = vrot.slane %v490, %v493
    %v496 = vsel %vm155, %v485, 0
    %498 = vmatprep.subr.mxu0 0.0
    %499 = vmatpush1.msra.mxu0 %v486
    %500 = vmatprep.subr.mxu0 0.0
    %501 = vmatpush1.msra.mxu0 %v487
    %502 = vmatprep.subr.mxu0 0.0
    %503 = vmatpush1.msra.mxu0 %v488
    %504 = vmatprep.subr.mxu0 0.0
    %505 = vmatpush1.msra.mxu0 %v489
    %506 = vmatprep.subr.mxu0 0.0
    %507 = vmatpush1.msra.mxu0 0.0
    %508 = vmatprep.subr.mxu0 0.0
    %509 = vmatpush1.msra.mxu0 0.0
    %510 = vmatprep.subr.mxu0 0.0
    %511 = vmatpush1.msra.mxu0 0.0
    %512 = vmatprep.subr.mxu0 0.0
    %513 = vmatpush1.msra.mxu0 0.0
    %514 = vmatprep.subr.mxu0 0.0
    %515 = vmatpush1.msra.mxu0 0.0
    %516 = vmatprep.subr.mxu0 0.0
    %517 = vmatpush1.msra.mxu0 0.0
    %518 = vmatprep.subr.mxu0 0.0
    %519 = vmatpush1.msra.mxu0 0.0
    %520 = vmatprep.subr.mxu0 0.0
    %521 = vmatpush1.msra.mxu0 0.0
    %522 = vmatprep.subr.mxu0 0.0
    %523 = vmatpush1.msra.mxu0 0.0
    %524 = vmatprep.subr.mxu0 0.0
    %525 = vmatpush1.msra.mxu0 0.0
    %526 = vmatprep.subr.mxu0 0.0
    %527 = vmatpush1.msra.mxu0 0.0
    %528 = vmatprep.subr.mxu0 0.0
    %529 = vmatpush1.msra.mxu0 0.0
    %530 = vmatprep.subr.mxu0 0.0
    %531 = vmatpush1.msra.mxu0 0.0
    %532 = vmatprep.subr.mxu0 0.0
    %533 = vmatpush1.msra.mxu0 0.0
    %534 = vmatprep.subr.mxu0 0.0
    %535 = vmatpush1.msra.mxu0 0.0
    %536 = vmatprep.subr.mxu0 0.0
    %537 = vmatpush1.msra.mxu0 0.0
    %538 = vmatprep.subr.mxu0 0.0
    %539 = vmatpush1.msra.mxu0 0.0
    %540 = vmatprep.subr.mxu0 0.0
    %541 = vmatpush1.msra.mxu0 0.0
    %542 = vmatprep.subr.mxu0 0.0
    %543 = vmatpush1.msra.mxu0 0.0
    %544 = vmatprep.subr.mxu0 0.0
    %545 = vmatpush1.msra.mxu0 0.0
    %546 = vmatprep.subr.mxu0 0.0
    %547 = vmatpush1.msra.mxu0 0.0
    %548 = vmatprep.subr.mxu0 0.0
    %549 = vmatpush1.msra.mxu0 0.0
    %550 = vmatprep.subr.mxu0 0.0
    %551 = vmatpush1.msra.mxu0 0.0
    %552 = vmatprep.subr.mxu0 0.0
    %553 = vmatpush1.msra.mxu0 0.0
    %554 = vmatprep.subr.mxu0 0.0
    %555 = vmatpush1.msra.mxu0 0.0
    %556 = vmatprep.subr.mxu0 0.0
    %557 = vmatpush1.msra.mxu0 0.0
    %558 = vmatprep.subr.mxu0 0.0
    %559 = vmatpush1.msra.mxu0 0.0
    %560 = vmatprep.subr.mxu0 0.0
    %561 = vmatpush1.msra.mxu0 0.0
    %562 = vmatprep.mubr.f32.mxu0 0.0
    %563 = vmatmul.mubr.f32.gmra.mrb[0].mxu0 %v496
    %v564 = vpop.f32.mrb[0].mxu0
    %v565 = vadd.f32 %v494, %v564
    %v566 = vpop.f32.mrb[0].mxu0
    %567 = vdwg.mxu0
    %v568 = vmax.f32 %v565, 0.0
    %v569 = vld [vmem:[#allocation2 + $0x108] sm:$0xff]
    %v570 = vld [vmem:[#allocation2 + $0x110] sm:$0xff]
    %v571 = vld [vmem:[#allocation2 + $0x118] sm:$0xff]
    %v572 = vld [vmem:[#allocation2 + $0x120] sm:$0xff]
    %v573 = vld [vmem:[#allocation2 + $0x12e] sm:$0x1]
    %v574 = vlaneseq
    %v575 = vshrl.u32 %v574, 7
    %v576 = vsub.s32 0, %v575
    %v577 = vrot.slane %v573, %v576
    %v579 = vsel %vm155, %v568, 0
    %581 = vmatprep.subr.mxu0 0.0
    %582 = vmatpush1.msra.mxu0 %v569
    %583 = vmatprep.subr.mxu0 0.0
    %584 = vmatpush1.msra.mxu0 %v570
    %585 = vmatprep.subr.mxu0 0.0
    %586 = vmatpush1.msra.mxu0 %v571
    %587 = vmatprep.subr.mxu0 0.0
    %588 = vmatpush1.msra.mxu0 %v572
    %589 = vmatprep.subr.mxu0 0.0
    %590 = vmatpush1.msra.mxu0 0.0
    %591 = vmatprep.subr.mxu0 0.0
    %592 = vmatpush1.msra.mxu0 0.0
    %593 = vmatprep.subr.mxu0 0.0
    %594 = vmatpush1.msra.mxu0 0.0
    %595 = vmatprep.subr.mxu0 0.0
    %596 = vmatpush1.msra.mxu0 0.0
    %597 = vmatprep.subr.mxu0 0.0
    %598 = vmatpush1.msra.mxu0 0.0
    %599 = vmatprep.subr.mxu0 0.0
    %600 = vmatpush1.msra.mxu0 0.0
    %601 = vmatprep.subr.mxu0 0.0
    %602 = vmatpush1.msra.mxu0 0.0
    %603 = vmatprep.subr.mxu0 0.0
    %604 = vmatpush1.msra.mxu0 0.0
    %605 = vmatprep.subr.mxu0 0.0
    %606 = vmatpush1.msra.mxu0 0.0
    %607 = vmatprep.subr.mxu0 0.0
    %608 = vmatpush1.msra.mxu0 0.0
    %609 = vmatprep.subr.mxu0 0.0
    %610 = vmatpush1.msra.mxu0 0.0
    %611 = vmatprep.subr.mxu0 0.0
    %612 = vmatpush1.msra.mxu0 0.0
    %613 = vmatprep.subr.mxu0 0.0
    %614 = vmatpush1.msra.mxu0 0.0
    %615 = vmatprep.subr.mxu0 0.0
    %616 = vmatpush1.msra.mxu0 0.0
    %617 = vmatprep.subr.mxu0 0.0
    %618 = vmatpush1.msra.mxu0 0.0
    %619 = vmatprep.subr.mxu0 0.0
    %620 = vmatpush1.msra.mxu0 0.0
    %621 = vmatprep.subr.mxu0 0.0
    %622 = vmatpush1.msra.mxu0 0.0
    %623 = vmatprep.subr.mxu0 0.0
    %624 = vmatpush1.msra.mxu0 0.0
    %625 = vmatprep.subr.mxu0 0.0
    %626 = vmatpush1.msra.mxu0 0.0
    %627 = vmatprep.subr.mxu0 0.0
    %628 = vmatpush1.msra.mxu0 0.0
    %629 = vmatprep.subr.mxu0 0.0
    %630 = vmatpush1.msra.mxu0 0.0
    %631 = vmatprep.subr.mxu0 0.0
    %632 = vmatpush1.msra.mxu0 0.0
    %633 = vmatprep.subr.mxu0 0.0
    %634 = vmatpush1.msra.mxu0 0.0
    %635 = vmatprep.subr.mxu0 0.0
    %636 = vmatpush1.msra.mxu0 0.0
    %637 = vmatprep.subr.mxu0 0.0
    %638 = vmatpush1.msra.mxu0 0.0
    %639 = vmatprep.subr.mxu0 0.0
    %640 = vmatpush1.msra.mxu0 0.0
    %641 = vmatprep.subr.mxu0 0.0
    %642 = vmatpush1.msra.mxu0 0.0
    %643 = vmatprep.subr.mxu0 0.0
    %644 = vmatpush1.msra.mxu0 0.0
    %645 = vmatprep.mubr.f32.mxu0 0.0
    %646 = vmatmul.mubr.f32.gmra.mrb[0].mxu0 %v579
    %v647 = vpop.f32.mrb[0].mxu0
    %v648 = vadd.f32 %v577, %v647
    %v649 = vpop.f32.mrb[0].mxu0
    %650 = vdwg.mxu0
    %v651 = vmax.f32 %v648, 0.0
    %v652 = vld [vmem:[#allocation2 + $0x12f] sm:$0x1]
    %v653 = vld [vmem:[#allocation2 + $0x130] sm:$0x1]
    %v654 = vlaneseq
    %v655 = vshrl.u32 %v654, 7
    %v656 = vsub.s32 0, %v655
    %v657 = vrot.slane %v652, %v656
    %v658 = vmul.f32 %v651, %v657
    %v659 = vsel %vm155, %v658, 0.0
    %660 = vadd.xlane.f32.xlu0 %v659
    %v661 = vpop.xlane.xlu0 %660
    %v662 = vlaneseq
    %v663 = vshrl.u32 %v662, 7
    %v664 = vsub.s32 0, %v663
    %v665 = vrot.slane %v653, %v664
    %v666 = vadd.f32 %v661, %v665
    %v668 = vcombine.high %v666, %v666
    %v670 = vunpack.c.l.s4 1966171168
    %v671 = vunpack.c.0.s8 %v670
    %v672 = vlaneseq
    %v673 = vshrl.u32 %v672, 7
    %v674 = vsub.s32 %v671, %v673
    %v675 = vrot.slane %v666, %v674
    %v677 = vunpack.c.l.s4 1966171168
    %v678 = vunpack.c.0.s8 %v677
    %v679 = vlaneseq
    %v680 = vshrl.u32 %v679, 7
    %v681 = vsub.s32 %v678, %v680
    %v682 = vrot.slane %v668, %v681
    %v683 = vcombine.high %v675, %v675
    %v684 = vcombine.high %v682, %v682
    %v686 = vunpack.c.l.s4 1966171168
    %v687 = vunpack.c.0.s8 %v686
    %v688 = vlaneseq
    %v689 = vshrl.u32 %v688, 7
    %v690 = vsub.s32 %v687, %v689
    %v691 = vrot.slane %v675, %v690
    %v693 = vunpack.c.l.s4 1966171168
    %v694 = vunpack.c.0.s8 %v693
    %v695 = vlaneseq
    %v696 = vshrl.u32 %v695, 7
    %v697 = vsub.s32 %v694, %v696
    %v698 = vrot.slane %v682, %v697
    %v700 = vunpack.c.l.s4 1966171168
    %v701 = vunpack.c.0.s8 %v700
    %v702 = vlaneseq
    %v703 = vshrl.u32 %v702, 7
    %v704 = vsub.s32 %v701, %v703
    %v705 = vrot.slane %v683, %v704
    %v707 = vunpack.c.l.s4 1966171168
    %v708 = vunpack.c.0.s8 %v707
    %v709 = vlaneseq
    %v710 = vshrl.u32 %v709, 7
    %v711 = vsub.s32 %v708, %v710
    %v712 = vrot.slane %v684, %v711
    %v713 = vcombine.high %v691, %v691
    %v714 = vcombine.high %v698, %v698
    %v715 = vcombine.high %v705, %v705
    %v716 = vcombine.high %v712, %v712
    %vm725 = vcmask 0
    %726 = vst.msk [vmem:[%s2] sm:$0x1] %vm725, %v691
    %727 = vst.msk [vmem:[%s2 + $0x1] sm:$0x1] %vm725, %v705
    %728 = vst.msk [vmem:[%s2 + $0x2] sm:$0x1] %vm725, %v713
    %729 = vst.msk [vmem:[%s2 + $0x3] sm:$0x1] %vm725, %v715
    %730 = vst.msk [vmem:[%s2 + $0x4] sm:$0x1] %vm725, %v698
    %731 = vst.msk [vmem:[%s2 + $0x5] sm:$0x1] %vm725, %v712
    %732 = vst.msk [vmem:[%s2 + $0x6] sm:$0x1] %vm725, %v714
    %733 = vst.msk [vmem:[%s2 + $0x7] sm:$0x1] %vm725, %v716
    // Predicated region
    $region14: #{model_forward.1} parent=1 // pred_check
      _
    $region15: #{model_forward.1} parent=1 // pred_check_branch
      %735 = sbr.rel (0) target = $region17
    $region16: #{model_forward.1} parent=1 // pred_region
      _
    $region17: #{model_forward.1} parent=1 // pred_fallthru
      _
    // Predicated region
    $region18: #{model_forward.1} parent=1 // pred_check
      _
    $region19: #{model_forward.1} parent=1 // pred_check_branch
      %737 = sbr.rel (0) target = $region21
    $region20: #{model_forward.1} parent=1 // pred_region
      _
    $region21: #{model_forward.1} parent=1 // pred_fallthru
      _
    %738 = vsyncpa [#allocation3], 1

</llo_original>
